<compile_context>
chip_gen: v7x
topology: tpu7x:2x2x1
jax: 0.10.0
libtpu: 0.0.40
codegen_flags: <defaults>
</compile_context>

<pallas_src>
import functools
import math

import jax
import jax.numpy as jnp
from jax import lax
from jax.experimental import pallas as pl
from jax.experimental.pallas import tpu as pltpu


def _round_up(a: int, b: int) -> int:
    return (a + b - 1) // b * b


# murmur3-style int32 finalizer (wrapping int32 arithmetic; constants expressed
# as their two's-complement int32 values).
_MIX1 = -2048144789   # 0x85EBCA6B
_MIX2 = -1028477387   # 0xC2B2AE35
_ROW_ODD = -1640531527  # 0x9E3779B9 (golden-ratio odd)
_COL_ODD = 1540483477   # 0x5BD1E995 (murmur2 odd)


def _hash_i32(x):
    x = x ^ lax.shift_right_logical(x, 16)
    x = x * jnp.int32(_MIX1)
    x = x ^ lax.shift_right_logical(x, 13)
    x = x * jnp.int32(_MIX2)
    x = x ^ lax.shift_right_logical(x, 16)
    return x


def _residual_ln_dropout_kernel(seed_ref, alpha_ref, beta_ref, x_ref, y_ref, o_ref,
                                *, eps: float, keep_prob: float, train: bool):
    # seed_ref/alpha_ref/beta_ref: (1,) scalars in SMEM
    # x_ref / y_ref / o_ref: (tm, D) tiles in VMEM
    y = y_ref[...].astype(jnp.float32)
    d = y.shape[-1]

    # LayerNormalization (custom): mean + *unbiased* std, eps added to std**2.
    mean = jnp.mean(y, axis=-1, keepdims=True)
    centered = y - mean
    var_unbiased = jnp.sum(centered * centered, axis=-1, keepdims=True) / float(d - 1)
    inv = lax.rsqrt(var_unbiased + eps)                      # EUP rsqrt (free slot)
    normed = alpha_ref[0] * centered * inv + beta_ref[0]

    # Dropout (training only): stateless per-element hash -> Bernoulli(keep_prob),
    # scaled by 1/keep_prob. Plain int32 VPU ops, no hardware PRNG needed.
    if train and keep_prob < 1.0:
        tile = pl.program_id(0)
        base = seed_ref[0] * jnp.int32(_MIX1) + tile * jnp.int32(_ROW_ODD)
        rows = lax.broadcasted_iota(jnp.int32, normed.shape, 0)
        cols = lax.broadcasted_iota(jnp.int32, normed.shape, 1)
        h = _hash_i32(rows * jnp.int32(_ROW_ODD) + cols * jnp.int32(_COL_ODD) + base)
        r = lax.shift_right_logical(h, 1)                    # uniform in [0, 2^31)
        thresh = jnp.int32(min(int(keep_prob * float(1 << 31)), (1 << 31) - 1))
        keep = r < thresh
        normed = jnp.where(keep, normed * (1.0 / keep_prob), 0.0)

    # Residual add, fused — the LayerNorm output never touches HBM.
    o_ref[...] = (x_ref[...].astype(jnp.float32) + normed).astype(o_ref.dtype)


def residual_connection(x, sublayer_out, alpha, bias, *,
                        eps: float = 1e-6,
                        dropout_rate: float = 0.0,
                        train: bool = False,
                        seed: int = 0,
                        tm: int = 512):
    """x, sublayer_out: (..., D). alpha, bias: scalar params (shape (1,)).

    Returns x + dropout(LayerNorm(sublayer_out)) with the spec's LayerNorm.
    """
    orig_shape = x.shape
    D = orig_shape[-1]
    rows = int(math.prod(orig_shape[:-1]))

    x2d = x.reshape(rows, D)
    y2d = sublayer_out.reshape(rows, D)

    # Row tile: multiple of 8 (sublane), as large as possible but capped so the
    # double-buffered f32 working set (2 ins + 1 out, 2 bufs each) stays well
    # inside the default VMEM window.
    vmem_budget = 24 << 20                         # ~24 MiB for pipelined tiles
    rows_budget = max(8, vmem_budget // (6 * 4 * max(D, 1)))
    tm_eff = min(tm, rows_budget, _round_up(rows, 8))
    tm_eff = max(8, (tm_eff // 8) * 8)
    rows_p = _round_up(rows, tm_eff)
    if rows_p != rows:
        pad = rows_p - rows
        x2d = jnp.pad(x2d, ((0, pad), (0, 0)))
        y2d = jnp.pad(y2d, ((0, pad), (0, 0)))

    seed_arr = jnp.asarray([seed], jnp.int32)
    alpha_arr = jnp.asarray(alpha, jnp.float32).reshape(1)
    beta_arr = jnp.asarray(bias, jnp.float32).reshape(1)

    kernel = functools.partial(
        _residual_ln_dropout_kernel,
        eps=float(eps),
        keep_prob=float(1.0 - dropout_rate),
        train=bool(train) and dropout_rate > 0.0,
    )

    out = pl.pallas_call(
        kernel,
        out_shape=jax.ShapeDtypeStruct((rows_p, D), x.dtype),
        grid=(rows_p // tm_eff,),
        in_specs=[
            pl.BlockSpec(memory_space=pltpu.MemorySpace.SMEM),   # seed  (1,) i32
            pl.BlockSpec(memory_space=pltpu.MemorySpace.SMEM),   # alpha (1,) f32
            pl.BlockSpec(memory_space=pltpu.MemorySpace.SMEM),   # bias  (1,) f32
            pl.BlockSpec((tm_eff, D), lambda i: (i, 0)),         # x tile
            pl.BlockSpec((tm_eff, D), lambda i: (i, 0)),         # sublayer(x) tile
        ],
        out_specs=pl.BlockSpec((tm_eff, D), lambda i: (i, 0)),
        compiler_params=pltpu.CompilerParams(
            dimension_semantics=("parallel",),                   # shard row tiles across TCs
        ),
    )(seed_arr, alpha_arr, beta_arr, x2d, y2d)

    return out[:rows].reshape(orig_shape)


if __name__ == "__main__":
    # Small shapes consistent with the module: batch=2, seq=8, hidden=32.
    B, S, D = 2, 8, 32
    EPS = 1e-6
    DROPOUT = 0.1

    key = jax.random.PRNGKey(0)
    kx, kw = jax.random.split(key)
    x = jax.random.normal(kx, (B, S, D), jnp.float32)

    # TODO(synk): `sublayer` is an arbitrary nn.Module callable in the PyTorch
    # spec; it is evaluated in plain JAX and its output passed to the kernel.
    W_sub = jax.random.normal(kw, (D, D), jnp.float32) / math.sqrt(D)
    sublayer = lambda t: jnp.tanh(t @ W_sub)
    y = sublayer(x)

    alpha = jnp.ones((1,), jnp.float32)    # LayerNormalization.alpha
    beta = jnp.zeros((1,), jnp.float32)    # LayerNormalization.bias

    # Eval mode (dropout = identity): must match the pure-JAX reference.
    out = residual_connection(x, y, alpha, beta, eps=EPS,
                              dropout_rate=DROPOUT, train=False)
    jax.block_until_ready(out)

    mean = jnp.mean(y, axis=-1, keepdims=True)
    std = jnp.std(y, axis=-1, keepdims=True, ddof=1)          # torch.std is unbiased
    ref = x + (alpha * (y - mean) / jnp.sqrt(std ** 2 + EPS) + beta)
    assert out.shape == (B, S, D)
    assert jnp.allclose(out, ref, atol=1e-5, rtol=1e-5)

    # Training mode: exercise the in-kernel hash-based dropout path.
    out_train = residual_connection(x, y, alpha, beta, eps=EPS,
                                    dropout_rate=DROPOUT, train=True, seed=123)
    jax.block_until_ready(out_train)
    assert out_train.shape == (B, S, D)
    assert bool(jnp.all(jnp.isfinite(out_train)))
    # Every element is either the eval value scaled normed-part or residual-only:
    delta_eval = ref - x
    delta_train = out_train - x
    keep_like = jnp.isclose(delta_train, delta_eval / (1.0 - DROPOUT), atol=1e-5)
    drop_like = jnp.isclose(delta_train, 0.0, atol=1e-5)
    assert bool(jnp.all(keep_like | drop_like))

    print("KERNEL_OK")
</pallas_src>

<mosaic_0001>
module attributes {stable_mosaic.version = 11 : i64} {
  func.func @_residual_ln_dropout_kernel(%arg0: i32, %arg1: memref<1xi32, #tpu.memory_space<smem>>, %arg2: memref<1xf32, #tpu.memory_space<smem>>, %arg3: memref<1xf32, #tpu.memory_space<smem>>, %arg4: memref<16x32xf32, #tpu.memory_space<vmem>>, %arg5: memref<16x32xf32, #tpu.memory_space<vmem>>, %arg6: memref<16x32xf32, #tpu.memory_space<vmem>>) attributes {dimension_semantics = [#tpu.dimension_semantics<parallel>], iteration_bounds = array<i64: 1>, scalar_prefetch = 0 : i64, scratch_operands = 0 : i64, tpu.core_type = #tpu.core_type<tc>, window_params = [{transform_indices = @transform_0, window_bounds = array<i64: 1>}, {transform_indices = @transform_1, window_bounds = array<i64: 1>}, {transform_indices = @transform_2, window_bounds = array<i64: 1>}, {transform_indices = @transform_3, window_bounds = array<i64: 16, 32>}, {transform_indices = @transform_4, window_bounds = array<i64: 16, 32>}, {transform_indices = @transform_5, window_bounds = array<i64: 16, 32>}]} {
    %c0 = arith.constant 0 : index
    %c0_0 = arith.constant 0 : index
    %0 = vector.load %arg5[%c0, %c0_0] : memref<16x32xf32, #tpu.memory_space<vmem>>, vector<16x32xf32>
    %cst = arith.constant dense<0.000000e+00> : vector<16xf32>
    %1 = vector.multi_reduction <add>, %0, %cst [1] : vector<16x32xf32> to vector<16xf32>
    %2 = vector.shape_cast %1 : vector<16xf32> to vector<16x1xf32>
    %cst_1 = arith.constant 3.200000e+01 : f32
    %3 = vector.broadcast %cst_1 : f32 to vector<16x1xf32>
    %4 = arith.divf %2, %3 : vector<16x1xf32>
    %5 = vector.broadcast %4 : vector<16x1xf32> to vector<16x32xf32>
    %6 = arith.subf %0, %5 : vector<16x32xf32>
    %7 = arith.mulf %6, %6 : vector<16x32xf32>
    %cst_2 = arith.constant dense<0.000000e+00> : vector<16xf32>
    %8 = vector.multi_reduction <add>, %7, %cst_2 [1] : vector<16x32xf32> to vector<16xf32>
    %9 = vector.shape_cast %8 : vector<16xf32> to vector<16x1xf32>
    %cst_3 = arith.constant 3.100000e+01 : f32
    %10 = vector.broadcast %cst_3 : f32 to vector<16x1xf32>
    %11 = arith.divf %9, %10 : vector<16x1xf32>
    %cst_4 = arith.constant 9.99999997E-7 : f32
    %12 = vector.broadcast %cst_4 : f32 to vector<16x1xf32>
    %13 = arith.addf %11, %12 : vector<16x1xf32>
    %14 = math.rsqrt %13 : vector<16x1xf32>
    %c0_5 = arith.constant 0 : index
    %15 = memref.load %arg2[%c0_5] : memref<1xf32, #tpu.memory_space<smem>>
    %16 = vector.broadcast %15 : f32 to vector<16x32xf32>
    %17 = arith.mulf %16, %6 : vector<16x32xf32>
    %18 = vector.broadcast %14 : vector<16x1xf32> to vector<16x32xf32>
    %19 = arith.mulf %17, %18 : vector<16x32xf32>
    %c0_6 = arith.constant 0 : index
    %20 = memref.load %arg3[%c0_6] : memref<1xf32, #tpu.memory_space<smem>>
    %21 = vector.broadcast %20 : f32 to vector<16x32xf32>
    %22 = arith.addf %19, %21 : vector<16x32xf32>
    %c0_7 = arith.constant 0 : index
    %c0_8 = arith.constant 0 : index
    %23 = vector.load %arg4[%c0_7, %c0_8] : memref<16x32xf32, #tpu.memory_space<vmem>>, vector<16x32xf32>
    %24 = arith.addf %23, %22 : vector<16x32xf32>
    %c0_9 = arith.constant 0 : index
    %c0_10 = arith.constant 0 : index
    %25 = vector.load %arg6[%c0_9, %c0_10] : memref<16x32xf32, #tpu.memory_space<vmem>>, vector<16x32xf32>
    tpu.vector_store %arg6[%c0_9, %c0_10], %24 {strides = array<i32>} : memref<16x32xf32, #tpu.memory_space<vmem>>, vector<16x32xf32>,
    return
  }
  func.func @transform_0(%arg0: i32) -> i32 {
    %c0_i32 = arith.constant 0 : i32
    %c0_i32_0 = arith.constant 0 : i32
    return %c0_i32 : i32
  }
  func.func @transform_1(%arg0: i32) -> i32 {
    %c0_i32 = arith.constant 0 : i32
    %c0_i32_0 = arith.constant 0 : i32
    return %c0_i32 : i32
  }
  func.func @transform_2(%arg0: i32) -> i32 {
    %c0_i32 = arith.constant 0 : i32
    %c0_i32_0 = arith.constant 0 : i32
    return %c0_i32 : i32
  }
  func.func @transform_3(%arg0: i32) -> (i32, i32) {
    %c0_i32 = arith.constant 0 : i32
    %c0_i32_0 = arith.constant 0 : i32
    return %arg0, %c0_i32 : i32, i32
  }
  func.func @transform_4(%arg0: i32) -> (i32, i32) {
    %c0_i32 = arith.constant 0 : i32
    %c0_i32_0 = arith.constant 0 : i32
    return %arg0, %c0_i32 : i32, i32
  }
  func.func @transform_5(%arg0: i32) -> (i32, i32) {
    %c0_i32 = arith.constant 0 : i32
    %c0_i32_0 = arith.constant 0 : i32
    return %arg0, %c0_i32 : i32, i32
  }
}

</mosaic_0001>

<llo_original>
// kernel: tpu_custom_call.1
$region0: #{tpu_custom_call.1}
  #allocation0 [shape = 'u32[]', space=smem, size = 0x4, offset = 0x4, fixed_abs, tag = 'smem constant byte address 0x4 - core index']
  #allocation1 [shape = 'u32[144,128]{1,0:T(1,128)}', space=vmem, size = 0x12000, scoped, tag = 'internal scratch']
  #allocation2 [shape = 's32[1]{0:T(128)S(6)}', space=smem, size = 0x200, scoped, tag = 'scoped memory for tpu_custom_call.1']
  #allocation3 [shape = 'f32[1]{0:T(128)S(6)}', space=smem, size = 0x200, scoped, tag = 'scoped memory for tpu_custom_call.1']
  #allocation4 [shape = 'f32[1]{0:T(128)S(6)}', space=smem, size = 0x200, scoped, tag = 'scoped memory for tpu_custom_call.1']
  %s0 = inlined_call_operand.<no memory space> [shape: s32[1], index: 0, kind: input, shape index: {}]
  %s1 = inlined_call_operand.<no memory space> [shape: f32[1], index: 1, kind: input, shape index: {}]
  %s2 = inlined_call_operand.<no memory space> [shape: f32[1], index: 2, kind: input, shape index: {}]
  %s3 = inlined_call_operand.hbm [shape: f32[16,32], index: 3, kind: input, shape index: {}]
  %s4 = inlined_call_operand.hbm [shape: f32[16,32], index: 4, kind: input, shape index: {}]
  %s5 = inlined_call_operand.hbm [shape: f32[16,32], index: 5, kind: output, shape index: {}]
  %s6 = sld [smem:[#allocation0]]
  $region38: #{tpu_custom_call.1} parent=0
    _
  %s8 = ssub.s32 1, %s6
  %s9 = scalar_select 0, %s8, %s6
  %10 = sst [smem:[#allocation2]] %s0
  %11 = sst [smem:[#allocation3]] %s1
  %12 = sst [smem:[#allocation4]] %s2
  $region1: #{tpu_custom_call.1} parent=0
    #allocation5 [shape = 'u8[8192]{0}', space=vmem, size = 0x2000, scoped, tag = 'input window, operand 3, single buffered']
    #allocation6 [shape = 's32[1]{0}', space=sflag, size = 0x4, scoped, tag = 'scoped memory for tpu_custom_call.1']
    #allocation7 [shape = 's32[1]{0}', space=sflag, size = 0x4, scoped, tag = 'scoped memory for tpu_custom_call.1']
    #allocation8 [shape = 'u8[8192]{0}', space=vmem, size = 0x2000, scoped, tag = 'input window, operand 4, single buffered']
    #allocation9 [shape = 's32[1]{0}', space=sflag, size = 0x4, scoped, tag = 'scoped memory for tpu_custom_call.1']
    #allocation10 [shape = 'u8[8192]{0}', space=vmem, size = 0x2000, scoped, tag = 'output window, operand 0, single buffered']
    %13 = vsyncpa [#allocation6], 0
    %14 = vsyncpa [#allocation9], 0
    %15 = vsyncpa [#allocation7], 0
    // Predicated region
    $region2: #{tpu_custom_call.1} parent=1 // pred_check
      _
    $region3: #{tpu_custom_call.1} parent=1 // pred_check_branch
      %17 = sbr.rel (0) target = $region5
    $region4: #{tpu_custom_call.1} parent=1 // pred_region
      _
    $region5: #{tpu_custom_call.1} parent=1 // pred_fallthru
      _
    // Predicated region
    $region6: #{tpu_custom_call.1} parent=1 // pred_check
      _
    $region7: #{tpu_custom_call.1} parent=1 // pred_check_branch
      %19 = sbr.rel (0) target = $region9
    $region8: #{tpu_custom_call.1} parent=1 // pred_region
      _
    $region9: #{tpu_custom_call.1} parent=1 // pred_fallthru
      _
    // Predicated region
    $region10: #{tpu_custom_call.1} parent=1 // pred_check
      _
    $region11: #{tpu_custom_call.1} parent=1 // pred_check_branch
      %21 = sbr.rel (0) target = $region13
    $region12: #{tpu_custom_call.1} parent=1 // pred_region
      _
    $region13: #{tpu_custom_call.1} parent=1 // pred_fallthru
      _
    // Predicated region
    $region14: #{tpu_custom_call.1} parent=1 // pred_check
      _
    $region15: #{tpu_custom_call.1} parent=1 // pred_check_branch
      %23 = sbr.rel (0) target = $region17
    $region16: #{tpu_custom_call.1} parent=1 // pred_region
      %s25 = ssub.s32 256, 256
      %26 = vsyncadd [#allocation6], %s25
      %s27 = sshll.u32 [#allocation5], 4
      %s28 = int_to_ptr.vmem [resolvable:$true] %s27
      %33 = dma.hbm_to_vmem [thread:$0]  %s3, 256, %s28, [#allocation6], 128, 128, 8
    $region17: #{tpu_custom_call.1} parent=1 // pred_fallthru
      _
    // Predicated region
    $region18: #{tpu_custom_call.1} parent=1 // pred_check
      _
    $region19: #{tpu_custom_call.1} parent=1 // pred_check_branch
      %35 = sbr.rel (0) target = $region21
    $region20: #{tpu_custom_call.1} parent=1 // pred_region
      %s37 = ssub.s32 256, 256
      %38 = vsyncadd [#allocation9], %s37
      %s39 = sshll.u32 [#allocation8], 4
      %s40 = int_to_ptr.vmem [resolvable:$true] %s39
      %45 = dma.hbm_to_vmem [thread:$0]  %s4, 256, %s40, [#allocation9], 128, 128, 8
    $region21: #{tpu_custom_call.1} parent=1 // pred_fallthru
      _
    // Predicated region
    $region22: #{tpu_custom_call.1} parent=1 // pred_check
      _
    $region23: #{tpu_custom_call.1} parent=1 // pred_check_branch
      %47 = sbr.rel (0) target = $region25
    $region24: #{tpu_custom_call.1} parent=1 // pred_region
      %48 = dma.done [#allocation6], 256
    $region25: #{tpu_custom_call.1} parent=1 // pred_fallthru
      _
    // Predicated region
    $region26: #{tpu_custom_call.1} parent=1 // pred_check
      _
    $region27: #{tpu_custom_call.1} parent=1 // pred_check_branch
      %50 = sbr.rel (0) target = $region29
    $region28: #{tpu_custom_call.1} parent=1 // pred_region
      %51 = dma.done [#allocation9], 256
    $region29: #{tpu_custom_call.1} parent=1 // pred_fallthru
      _
    %v52 = vld [vmem:[#allocation8] sm:$0xff]
    %v53 = vld [vmem:[#allocation8 + $0x8] sm:$0xff]
    %vm54 = vcmask 261120
    %v55 = vsel %vm54, %v52, 0.0
    %56 = vadd.xlane.f32.xlu0 %v55
    %v57 = vpop.xlane.xlu0 %56
    %v58 = vsel %vm54, %v53, 0.0
    %59 = vadd.xlane.f32.xlu0 %v58
    %v60 = vpop.xlane.xlu0 %59
    %v61 = vrcp.pop 32.0
    %v62 = vmul.f32 %v57, %v61
    %v63 = vmul.f32 %v60, %v61
    %v64 = vsub.f32 %v52, %v62
    %v65 = vsub.f32 %v53, %v63
    %v66 = vmul.f32 %v64, %v64
    %v67 = vmul.f32 %v65, %v65
    %v68 = vsel %vm54, %v66, 0.0
    %69 = vadd.xlane.f32.xlu0 %v68
    %v70 = vpop.xlane.xlu0 %69
    %v71 = vsel %vm54, %v67, 0.0
    %72 = vadd.xlane.f32.xlu0 %v71
    %v73 = vpop.xlane.xlu0 %72
    %v74 = vrcp.pop 31.0
    %v75 = vmul.f32 %v70, %v74
    %v76 = vmul.f32 %v73, %v74
    %v77 = vadd.f32 %v75, 1e-06
    %v78 = vadd.f32 %v76, 1e-06
    %v79 = vrsqrt.pop %v77
    %v80 = vrsqrt.pop %v78
    %s81 = sld [smem:[#allocation3]]
    %v82 = vstv %s81
    %v83 = vmul.f32 %v82, %v64
    %v84 = vmul.f32 %v82, %v65
    %v85 = vmul.f32 %v83, %v79
    %v86 = vmul.f32 %v84, %v80
    %s87 = sld [smem:[#allocation4]]
    %v88 = vstv %s87
    %v89 = vadd.f32 %v85, %v88
    %v90 = vadd.f32 %v86, %v88
    %v91 = vld [vmem:[#allocation5] sm:$0xff]
    %v92 = vld [vmem:[#allocation5 + $0x8] sm:$0xff]
    %v93 = vadd.f32 %v91, %v89
    %v94 = vadd.f32 %v92, %v90
    %95 = vst.msk [vmem:[#allocation10] sm:$0xff] %vm54, %v93
    %96 = vst.msk [vmem:[#allocation10 + $0x8] sm:$0xff] %vm54, %v94
    // Predicated region
    $region30: #{tpu_custom_call.1} parent=1 // pred_check
      _
    $region31: #{tpu_custom_call.1} parent=1 // pred_check_branch
      %98 = sbr.rel (0) target = $region33
    $region32: #{tpu_custom_call.1} parent=1 // pred_region
      %s100 = ssub.s32 256, 256
      %101 = vsyncadd [#allocation7], %s100
      %s102 = sshll.u32 [#allocation10], 4
      %s103 = int_to_ptr.vmem [resolvable:$true] %s102
      %108 = dma.vmem_to_hbm [thread:$0]  %s103, 256, %s5, [#allocation7], 128, 128, 8
    $region33: #{tpu_custom_call.1} parent=1 // pred_fallthru
      _
    // Predicated region
    $region34: #{tpu_custom_call.1} parent=1 // pred_check
      _
    $region35: #{tpu_custom_call.1} parent=1 // pred_check_branch
      %110 = sbr.rel (0) target = $region37
    $region36: #{tpu_custom_call.1} parent=1 // pred_region
      %111 = dma.done [#allocation7], 256
    $region37: #{tpu_custom_call.1} parent=1 // pred_fallthru
      _
    %112 = vsyncpa [#allocation6], 1
    %113 = vsyncpa [#allocation9], 1
    %114 = vsyncpa [#allocation7], 1

</llo_original>
